<compile_context>
chip_gen: v6e
topology: v6e:2x2x1
jax: 0.10.0
libtpu: 0.0.40
codegen_flags: <defaults>
</compile_context>

<pallas_src>
import jax
import jax.numpy as jnp
from jax import lax
from jax.experimental import pallas as pl
from jax.experimental.pallas import tpu as pltpu

BN_EPS = 1e-3
LANE = 128
B3_MID = 64                 # branch3x3 channels (both convs)
B7_OUT = 32                 # branch7x7 channels
OUT_CH = B3_MID + B7_OUT    # 96 concatenated output channels


def _round_up(x, m):
    return (x + m - 1) // m * m


def _pad_axis(a, axis, target):
    pad = target - a.shape[axis]
    if pad == 0:
        return a
    cfg = [(0, 0)] * a.ndim
    cfg[axis] = (0, pad)
    return jnp.pad(a, cfg)


def _choose_tile_m(m, max_tile=1024, min_grid=4):
    """Largest multiple-of-8 tile that divides the 8-rounded M, capped so the
    grid keeps >= min_grid steps (v7x megacore sharding + DMA pipelining)."""
    mp = _round_up(max(m, 8), 8)
    cap = min(max_tile, max(8, mp // min_grid))
    tile = 8
    for t in range(16, cap + 1, 8):
        if mp % t == 0:
            tile = t
    return tile, mp


def _vmem_limit_bytes(tile_m, k_list, coutp, out_itemsize):
    """Per-call footprint: double-buffered bf16 patch streams + (conservatively
    double-buffered) resident bf16 weights + f32 bias + double-buffered out."""
    patches = sum(2 * tile_m * k * 2 for k in k_list)
    weights = sum(2 * k * coutp * 2 for k in k_list)
    bias = 2 * coutp * 4
    out = 2 * tile_m * coutp * out_itemsize
    need = patches + weights + bias + out
    return int(min(max(int(need * 1.5) + (2 << 20), 8 << 20), 48 << 20))


# ---------------------------------------------------------------------------
# Pallas kernel: fused sum_i(patches_i @ W_i) + bias + ReLU
# (BN scale pre-folded into W; output channels padded to a 128-lane store)
# ---------------------------------------------------------------------------
def fused_conv_matmul(patches, weights, bias, *, tile_m, out_dtype):
    n_in = len(patches)
    assert n_in == len(weights) and n_in >= 1
    mp = patches[0].shape[0]
    coutp = weights[0].shape[1]
    assert tile_m % 8 == 0 and mp % tile_m == 0
    assert coutp % LANE == 0
    for p, w in zip(patches, weights):
        assert p.shape[0] == mp and p.shape[1] == w.shape[0]
        assert w.shape[1] == coutp
    assert bias.shape == (1, coutp)

    def kernel(*refs):
        p_refs = refs[:n_in]
        w_refs = refs[n_in:2 * n_in]
        b_ref = refs[2 * n_in]
        o_ref = refs[2 * n_in + 1]
        acc = jnp.dot(p_refs[0][...], w_refs[0][...],
                      preferred_element_type=jnp.float32)
        for pr, wr in zip(p_refs[1:], w_refs[1:]):
            acc = acc + jnp.dot(pr[...], wr[...],
                                preferred_element_type=jnp.float32)
        o_ref[...] = jnp.maximum(acc + b_ref[...], 0.0).astype(o_ref.dtype)

    in_specs = (
        # Patch streams: tiled over M, full (un-padded) K as last dim.
        [pl.BlockSpec((p.shape[1] and tile_m, p.shape[1]), lambda i: (i, 0))
         for p in patches]
        # Resident weights / bias (constant index_map -> stay in VMEM).
        + [pl.BlockSpec((w.shape[0], coutp), lambda i: (0, 0)) for w in weights]
        + [pl.BlockSpec((1, coutp), lambda i: (0, 0))]
    )

    return pl.pallas_call(
        kernel,
        out_shape=jax.ShapeDtypeStruct((mp, coutp), out_dtype),
        grid_spec=pltpu.PrefetchScalarGridSpec(
            num_scalar_prefetch=0,
            grid=(mp // tile_m,),
            in_specs=in_specs,
            out_specs=pl.BlockSpec((tile_m, coutp), lambda i: (i, 0)),
        ),
        compiler_params=pltpu.CompilerParams(
            dimension_semantics=("parallel",),
            vmem_limit_bytes=_vmem_limit_bytes(
                tile_m, [p.shape[1] for p in patches], coutp,
                jnp.dtype(out_dtype).itemsize),
        ),
    )(*patches, *weights, bias)


# ---------------------------------------------------------------------------
# im2col (wrapper-side) + parameter folding / packing
# ---------------------------------------------------------------------------
def _im2col_nhwc(x, kh, kw, stride, pad):
    N, H, W, C = x.shape
    xp = jnp.pad(x, ((0, 0), (pad, pad), (pad, pad), (0, 0)))
    Ho = (H + 2 * pad - kh) // stride + 1
    Wo = (W + 2 * pad - kw) // stride + 1
    cols = []
    for i in range(kh):
        for j in range(kw):
            cols.append(
                xp[:, i:i + (Ho - 1) * stride + 1:stride,
                      j:j + (Wo - 1) * stride + 1:stride, :]
            )
    P = jnp.stack(cols, axis=3)                 # (N, Ho, Wo, kh*kw, C)
    P = P.reshape(N * Ho * Wo, kh * kw * C)     # K ordered as (kh, kw, Cin)
    return P, Ho, Wo


def _fold_conv_bn(weight, gamma, beta, mean, var):
    """Conv2d(bias=False)+BN(eval): fold BN scale into a (K, Cout) weight."""
    cout, cin, kh, kw = weight.shape
    scale = gamma / jnp.sqrt(var + BN_EPS)
    bias = beta - mean * scale
    w_mat = jnp.transpose(weight, (2, 3, 1, 0)).reshape(kh * kw * cin, cout)
    return w_mat * scale[None, :], bias


def prepare_inception_z_params(params):
    """One-time folding/packing -- do this once, NOT per forward call."""
    w31, b31 = _fold_conv_bn(*params["b3_1"])    # (36, 64)
    w32, b32 = _fold_conv_bn(*params["b3_2"])    # (576, 64)
    w7, b7 = _fold_conv_bn(*params["b7"])        # (196, 32)

    # Stage 1: branch3x3 first conv. K stays 36 (un-padded); only Cout 64->128.
    w31p = _pad_axis(w31, 1, LANE)                                  # (36, 128)
    b31p = _pad_axis(b31, 0, LANE).reshape(1, LANE)

    # Stage 2: branch3x3 second conv + branch7x7 as TWO weight blocks that
    # both target the full 128-lane output:
    #   cols 0:64  <- branch3x3 conv2, cols 64:96 <- branch7x7, cols 96:128 = 0
    w32p = _pad_axis(w32, 1, LANE)                                  # (576, 128)
    w7p = jnp.pad(w7, ((0, 0), (B3_MID, LANE - OUT_CH)))            # (196, 128)
    bfin = jnp.concatenate(
        [b32, b7, jnp.zeros((LANE - OUT_CH,), jnp.float32)]).reshape(1, LANE)

    return {
        "b31_w": w31p.astype(jnp.bfloat16),
        "b31_b": b31p.astype(jnp.float32),
        "fin_w32": w32p.astype(jnp.bfloat16),
        "fin_w7": w7p.astype(jnp.bfloat16),
        "fin_b": bfin.astype(jnp.float32),
    }


def inception_z_forward(x_nchw, prep):
    n = x_nchw.shape[0]
    x = jnp.transpose(x_nchw, (0, 2, 3, 1)).astype(jnp.bfloat16)   # NCHW -> NHWC

    # ---- Stage 1: branch3x3 conv1 (3x3, stride 2, pad 1), bf16 output ----
    p1, ho, wo = _im2col_nhwc(x, 3, 3, 2, 1)            # (M1, 36) bf16
    m1 = p1.shape[0]
    tile1, mp1 = _choose_tile_m(m1)
    if mp1 != m1:                                       # fallback only if M % 8 != 0
        p1 = _pad_axis(p1, 0, mp1)
    y1 = fused_conv_matmul([p1], [prep["b31_w"]], prep["b31_b"],
                           tile_m=tile1, out_dtype=jnp.bfloat16)
    y1 = y1[:m1, :B3_MID].reshape(n, ho, wo, B3_MID)    # drop padded rows/chans

    # ---- Stage 2: branch3x3 conv2 (3x3 s1 p1 on y1) + branch7x7 (7x7 s2 p3)
    #      as ONE dual-input kernel producing the concatenated 96-ch output ----
    p2, ho2, wo2 = _im2col_nhwc(y1, 3, 3, 1, 1)         # (M2, 576) bf16
    p3, ho3, wo3 = _im2col_nhwc(x, 7, 7, 2, 3)          # (M2, 196) bf16
    assert (ho2, wo2) == (ho3, wo3)
    m2 = p2.shape[0]
    assert p3.shape[0] == m2
    tile2, mp2 = _choose_tile_m(m2)
    if mp2 != m2:
        p2 = _pad_axis(p2, 0, mp2)
        p3 = _pad_axis(p3, 0, mp2)
    yc = fused_conv_matmul([p2, p3], [prep["fin_w32"], prep["fin_w7"]],
                           prep["fin_b"], tile_m=tile2, out_dtype=jnp.float32)
    out = yc[:m2, :OUT_CH].reshape(n, ho2, wo2, OUT_CH)
    return jnp.transpose(out, (0, 3, 1, 2))             # NHWC -> NCHW


# ---------------------------------------------------------------------------
# References
# ---------------------------------------------------------------------------
def _ref_basic_conv2d_f32(x, weight, gamma, beta, mean, var, *, stride, pad):
    y = lax.conv_general_dilated(
        x, weight, (stride, stride), [(pad, pad), (pad, pad)],
        dimension_numbers=("NCHW", "OIHW", "NCHW"))
    scale = (gamma / jnp.sqrt(var + BN_EPS)).reshape(1, -1, 1, 1)
    bias = (beta - mean * gamma / jnp.sqrt(var + BN_EPS)).reshape(1, -1, 1, 1)
    return jnp.maximum(y * scale + bias, 0.0)


def _ref_forward_f32(x, params):
    b3 = _ref_basic_conv2d_f32(x, *params["b3_1"], stride=2, pad=1)
    b3 = _ref_basic_conv2d_f32(b3, *params["b3_2"], stride=1, pad=1)
    b7 = _ref_basic_conv2d_f32(x, *params["b7"], stride=2, pad=3)
    return jnp.concatenate([b3, b7], axis=1)


def _ref_basic_conv2d_bf16(x, weight, gamma, beta, mean, var, *, stride, pad):
    # Mirrors the kernel's quantization exactly: folded bf16 weights,
    # bf16 activations, f32 accumulation, f32 bias + ReLU.
    scale = gamma / jnp.sqrt(var + BN_EPS)
    bias = (beta - mean * scale).reshape(1, -1, 1, 1)
    wf = (weight * scale[:, None, None, None]).astype(jnp.bfloat16)
    y = lax.conv_general_dilated(
        x.astype(jnp.bfloat16), wf, (stride, stride), [(pad, pad), (pad, pad)],
        dimension_numbers=("NCHW", "OIHW", "NCHW"),
        preferred_element_type=jnp.float32)
    return jnp.maximum(y + bias, 0.0)


def _ref_forward_bf16(x, params):
    b3 = _ref_basic_conv2d_bf16(x, *params["b3_1"], stride=2, pad=1)
    b3 = _ref_basic_conv2d_bf16(b3, *params["b3_2"], stride=1, pad=1)
    b7 = _ref_basic_conv2d_bf16(x, *params["b7"], stride=2, pad=3)
    return jnp.concatenate([b3, b7], axis=1)


# ---------------------------------------------------------------------------
# Deterministic parameter init
# ---------------------------------------------------------------------------
def _make_basic_conv_params(key, cin, cout, k):
    kw_, kg, kb, km, kv = jax.random.split(key, 5)
    weight = jax.random.normal(kw_, (cout, cin, k, k), jnp.float32) * 0.1
    gamma = jax.random.uniform(kg, (cout,), jnp.float32, 0.5, 1.5)
    beta = jax.random.normal(kb, (cout,), jnp.float32) * 0.1
    mean = jax.random.normal(km, (cout,), jnp.float32) * 0.1
    var = jax.random.uniform(kv, (cout,), jnp.float32, 0.5, 1.5)
    return (weight, gamma, beta, mean, var)


if __name__ == "__main__":
    n, c_in, h, w = 2, 4, 16, 16
    key = jax.random.PRNGKey(0)
    kx, k1, k2, k3 = jax.random.split(key, 4)

    x = jax.random.normal(kx, (n, c_in, h, w), jnp.float32)
    params = {
        "b3_1": _make_basic_conv_params(k1, c_in, 64, 3),  # 3x3 stride2 pad1
        "b3_2": _make_basic_conv_params(k2, 64, 64, 3),    # 3x3 stride1 pad1 "same"
        "b7":   _make_basic_conv_params(k3, c_in, 32, 7),  # 7x7 stride2 pad3
    }

    prep = prepare_inception_z_params(params)       # one-time folding/packing
    fwd = jax.jit(inception_z_forward)

    out = jax.block_until_ready(fwd(x, prep))
    ref_bf16 = jax.block_until_ready(_ref_forward_bf16(x, params))
    ref_f32 = jax.block_until_ready(_ref_forward_f32(x, params))

    assert out.shape == (n, OUT_CH, 8, 8), out.shape
    # Tight check vs a reference using identical bf16/f32 quantization.
    err_m = float(jnp.max(jnp.abs(out - ref_bf16)))
    assert jnp.allclose(out, ref_bf16, atol=2e-2, rtol=2e-2), err_m
    # Loose sanity check vs full-f32 PyTorch semantics (bf16 approximation).
    err_f = float(jnp.max(jnp.abs(out - ref_f32)))
    assert err_f < 0.15, err_f

    print("KERNEL_OK")
</pallas_src>

<mosaic_0001>
module attributes {stable_mosaic.version = 11 : i64} {
  func.func @kernel(%arg0: i32, %arg1: memref<32x36xbf16, #tpu.memory_space<vmem>>, %arg2: memref<36x128xbf16, #tpu.memory_space<vmem>>, %arg3: memref<1x128xf32, #tpu.memory_space<vmem>>, %arg4: memref<32x128xbf16, #tpu.memory_space<vmem>>) attributes {dimension_semantics = [#tpu.dimension_semantics<parallel>], iteration_bounds = array<i64: 4>, scalar_prefetch = 0 : i64, scratch_operands = 0 : i64, tpu.core_type = #tpu.core_type<tc>, window_params = [{transform_indices = @transform_0, window_bounds = array<i64: 32, 36>}, {pipeline_mode = #tpu.pipeline_mode<synchronous>, transform_indices = @transform_1, window_bounds = array<i64: 36, 128>}, {pipeline_mode = #tpu.pipeline_mode<synchronous>, transform_indices = @transform_2, window_bounds = array<i64: 1, 128>}, {transform_indices = @transform_3, window_bounds = array<i64: 32, 128>}]} {
    %c0 = arith.constant 0 : index
    %c0_0 = arith.constant 0 : index
    %0 = vector.load %arg1[%c0, %c0_0] : memref<32x36xbf16, #tpu.memory_space<vmem>>, vector<32x36xbf16>
    %c0_1 = arith.constant 0 : index
    %c0_2 = arith.constant 0 : index
    %1 = vector.load %arg2[%c0_1, %c0_2] : memref<36x128xbf16, #tpu.memory_space<vmem>>, vector<36x128xbf16>
    %cst = arith.constant dense<0.000000e+00> : vector<32x128xf32>
    %2 = tpu.matmul %0, %1, %cst {dimension_numbers = #tpu.dot_dimension_numbers<[1], [0], [0], [1], [0, 0, 1, 1], [], []>} : vector<32x36xbf16>, vector<36x128xbf16>, vector<32x128xf32> -> vector<32x128xf32>
    %c0_3 = arith.constant 0 : index
    %c0_4 = arith.constant 0 : index
    %3 = vector.load %arg3[%c0_3, %c0_4] : memref<1x128xf32, #tpu.memory_space<vmem>>, vector<1x128xf32>
    %4 = vector.broadcast %3 : vector<1x128xf32> to vector<32x128xf32>
    %5 = arith.addf %2, %4 : vector<32x128xf32>
    %cst_5 = arith.constant 0.000000e+00 : f32
    %6 = vector.broadcast %cst_5 : f32 to vector<32x128xf32>
    %7 = arith.maximumf %5, %6 : vector<32x128xf32>
    %8 = arith.truncf %7 : vector<32x128xf32> to vector<32x128xbf16>
    %c0_6 = arith.constant 0 : index
    %c0_7 = arith.constant 0 : index
    %9 = vector.load %arg4[%c0_6, %c0_7] : memref<32x128xbf16, #tpu.memory_space<vmem>>, vector<32x128xbf16>
    tpu.vector_store %arg4[%c0_6, %c0_7], %8 {strides = array<i32>} : memref<32x128xbf16, #tpu.memory_space<vmem>>, vector<32x128xbf16>,
    return
  }
  func.func @transform_0(%arg0: i32) -> (i32, i32) {
    %c0_i32 = arith.constant 0 : i32
    %c0_i32_0 = arith.constant 0 : i32
    return %arg0, %c0_i32 : i32, i32
  }
  func.func @transform_1(%arg0: i32) -> (i32, i32) {
    %c0_i32 = arith.constant 0 : i32
    %c0_i32_0 = arith.constant 0 : i32
    %c0_i32_1 = arith.constant 0 : i32
    return %c0_i32, %c0_i32_0 : i32, i32
  }
  func.func @transform_2(%arg0: i32) -> (i32, i32) {
    %c0_i32 = arith.constant 0 : i32
    %c0_i32_0 = arith.constant 0 : i32
    %c0_i32_1 = arith.constant 0 : i32
    return %c0_i32, %c0_i32_0 : i32, i32
  }
  func.func @transform_3(%arg0: i32) -> (i32, i32) {
    %c0_i32 = arith.constant 0 : i32
    %c0_i32_0 = arith.constant 0 : i32
    return %arg0, %c0_i32 : i32, i32
  }
}

module attributes {stable_mosaic.version = 11 : i64} {
  func.func @kernel(%arg0: i32, %arg1: memref<32x576xbf16, #tpu.memory_space<vmem>>, %arg2: memref<32x196xbf16, #tpu.memory_space<vmem>>, %arg3: memref<576x128xbf16, #tpu.memory_space<vmem>>, %arg4: memref<196x128xbf16, #tpu.memory_space<vmem>>, %arg5: memref<1x128xf32, #tpu.memory_space<vmem>>, %arg6: memref<32x128xf32, #tpu.memory_space<vmem>>) attributes {dimension_semantics = [#tpu.dimension_semantics<parallel>], iteration_bounds = array<i64: 4>, scalar_prefetch = 0 : i64, scratch_operands = 0 : i64, tpu.core_type = #tpu.core_type<tc>, window_params = [{transform_indices = @transform_0, window_bounds = array<i64: 32, 576>}, {transform_indices = @transform_1, window_bounds = array<i64: 32, 196>}, {pipeline_mode = #tpu.pipeline_mode<synchronous>, transform_indices = @transform_2, window_bounds = array<i64: 576, 128>}, {pipeline_mode = #tpu.pipeline_mode<synchronous>, transform_indices = @transform_3, window_bounds = array<i64: 196, 128>}, {pipeline_mode = #tpu.pipeline_mode<synchronous>, transform_indices = @transform_4, window_bounds = array<i64: 1, 128>}, {transform_indices = @transform_5, window_bounds = array<i64: 32, 128>}]} {
    %c0 = arith.constant 0 : index
    %c0_0 = arith.constant 0 : index
    %0 = vector.load %arg1[%c0, %c0_0] : memref<32x576xbf16, #tpu.memory_space<vmem>>, vector<32x576xbf16>
    %c0_1 = arith.constant 0 : index
    %c0_2 = arith.constant 0 : index
    %1 = vector.load %arg3[%c0_1, %c0_2] : memref<576x128xbf16, #tpu.memory_space<vmem>>, vector<576x128xbf16>
    %cst = arith.constant dense<0.000000e+00> : vector<32x128xf32>
    %2 = tpu.matmul %0, %1, %cst {dimension_numbers = #tpu.dot_dimension_numbers<[1], [0], [0], [1], [0, 0, 1, 1], [], []>} : vector<32x576xbf16>, vector<576x128xbf16>, vector<32x128xf32> -> vector<32x128xf32>
    %c0_3 = arith.constant 0 : index
    %c0_4 = arith.constant 0 : index
    %3 = vector.load %arg2[%c0_3, %c0_4] : memref<32x196xbf16, #tpu.memory_space<vmem>>, vector<32x196xbf16>
    %c0_5 = arith.constant 0 : index
    %c0_6 = arith.constant 0 : index
    %4 = vector.load %arg4[%c0_5, %c0_6] : memref<196x128xbf16, #tpu.memory_space<vmem>>, vector<196x128xbf16>
    %cst_7 = arith.constant dense<0.000000e+00> : vector<32x128xf32>
    %5 = tpu.matmul %3, %4, %cst_7 {dimension_numbers = #tpu.dot_dimension_numbers<[1], [0], [0], [1], [0, 0, 1, 1], [], []>} : vector<32x196xbf16>, vector<196x128xbf16>, vector<32x128xf32> -> vector<32x128xf32>
    %6 = arith.addf %2, %5 : vector<32x128xf32>
    %c0_8 = arith.constant 0 : index
    %c0_9 = arith.constant 0 : index
    %7 = vector.load %arg5[%c0_8, %c0_9] : memref<1x128xf32, #tpu.memory_space<vmem>>, vector<1x128xf32>
    %8 = vector.broadcast %7 : vector<1x128xf32> to vector<32x128xf32>
    %9 = arith.addf %6, %8 : vector<32x128xf32>
    %cst_10 = arith.constant 0.000000e+00 : f32
    %10 = vector.broadcast %cst_10 : f32 to vector<32x128xf32>
    %11 = arith.maximumf %9, %10 : vector<32x128xf32>
    %c0_11 = arith.constant 0 : index
    %c0_12 = arith.constant 0 : index
    %12 = vector.load %arg6[%c0_11, %c0_12] : memref<32x128xf32, #tpu.memory_space<vmem>>, vector<32x128xf32>
    tpu.vector_store %arg6[%c0_11, %c0_12], %11 {strides = array<i32>} : memref<32x128xf32, #tpu.memory_space<vmem>>, vector<32x128xf32>,
    return
  }
  func.func @transform_0(%arg0: i32) -> (i32, i32) {
    %c0_i32 = arith.constant 0 : i32
    %c0_i32_0 = arith.constant 0 : i32
    return %arg0, %c0_i32 : i32, i32
  }
  func.func @transform_1(%arg0: i32) -> (i32, i32) {
    %c0_i32 = arith.constant 0 : i32
    %c0_i32_0 = arith.constant 0 : i32
    return %arg0, %c0_i32 : i32, i32
  }
  func.func @transform_2(%arg0: i32) -> (i32, i32) {
    %c0_i32 = arith.constant 0 : i32
    %c0_i32_0 = arith.constant 0 : i32
    %c0_i32_1 = arith.constant 0 : i32
    return %c0_i32, %c0_i32_0 : i32, i32
  }
  func.func @transform_3(%arg0: i32) -> (i32, i32) {
    %c0_i32 = arith.constant 0 : i32
    %c0_i32_0 = arith.constant 0 : i32
    %c0_i32_1 = arith.constant 0 : i32
    return %c0_i32, %c0_i32_0 : i32, i32
  }
  func.func @transform_4(%arg0: i32) -> (i32, i32) {
    %c0_i32 = arith.constant 0 : i32
    %c0_i32_0 = arith.constant 0 : i32
    %c0_i32_1 = arith.constant 0 : i32
    return %c0_i32, %c0_i32_0 : i32, i32
  }
  func.func @transform_5(%arg0: i32) -> (i32, i32) {
    %c0_i32 = arith.constant 0 : i32
    %c0_i32_0 = arith.constant 0 : i32
    return %arg0, %c0_i32 : i32, i32
  }
}

</mosaic_0001>

<llo_original>
// kernel: inception_z_forward.2
$region0: #{inception_z_forward.2}
  #allocation0 [shape = 'u32[]', space=smem, size = 0x4, offset = 0x4, fixed_abs, tag = 'smem constant byte address 0x4 - core index']
  #allocation1 [shape = 'u32[144,128]{1,0:T(1,128)}', space=vmem, size = 0x12000, scoped, tag = 'internal scratch']
  %s0 = inlined_call_operand.vmem [shape: bf16[128,36], index: 0, kind: input, shape index: {}]
  %s1 = inlined_call_operand.vmem [shape: bf16[36,128], index: 1, kind: input, shape index: {}]
  %s2 = inlined_call_operand.vmem [shape: f32[1,128], index: 2, kind: input, shape index: {}]
  %s3 = inlined_call_operand.vmem [shape: bf16[128,128], index: 3, kind: output, shape index: {}]
  %s4 = sld [smem:[#allocation0]]
  $region45: #{inception_z_forward.2} parent=0
    _
  %s6 = ssub.s32 1, %s4
  %s7 = scalar_select 0, %s6, %s4
  loop: start=0, step=1, limit=6
  $region2: #{inception_z_forward.2} parent=0 // loop_pre_header
    _
  $region3: #{inception_z_forward.2} parent=0 // loop_header
    %s9 = sphi 0, %s13
    %p10 = scmp.ge.s32.totalorder %s9, 6
    %s19 = sphi 0, %s21
    %s22 = sphi 0, %s19
    %s23 = sphi 0, %s22
    %s39 = sphi 0, %s23
    %s43 = sphi 0, %s43
    %s45 = sphi 0, %s43
    %s46 = sphi 0, %s45
    %s60 = sphi 0, %s46
    %s64 = sphi 0, %s64
    %s66 = sphi 0, %s64
    %s67 = sphi 0, %s66
    %s81 = sphi 0, %s67
    %s87 = sphi 0, %s89
    %s90 = sphi 0, %s87
    %s91 = sphi 0, %s90
    %s107 = sphi 0, %s91
  $region4: #{inception_z_forward.2} parent=0 // loop_header_branch
    %12 = sbr.rel (%p10) target = $region8
  $region5: #{inception_z_forward.2} parent=0 // loop_body
    %s14 = ssub.s32 %s9, 1
    %s15 = ssub.s32 %s9, 2
    %s16 = sadd.s32 %s9, 1
    %s17 = ssub.s32 %s9, %s16
    %p18 = scmp.eq.s32.totalorder %s17, 0
    %s20 = sadd.s32 %s19, 1
    %s21 = scalar_select %p18, %s19, %s20
    %p24 = pneg %p18
    %p25 = scmp.eq.s32.totalorder %s9, 3
    %p26 = por %p24, %p25
    %p27 = scmp.ne.s32.totalorder %s19, %s22
    %p28 = scmp.eq.s32.totalorder %s9, 0
    %p29 = por %p27, %p28
    %p30 = scmp.ne.s32.totalorder %s19, %s22
    %p31 = scmp.eq.s32.totalorder %s14, 3
    %p32 = por %p30, %p31
    %p33 = scmp.ne.s32.totalorder %s22, %s23
    %p34 = scmp.eq.s32.totalorder %s14, 0
    %p35 = por %p33, %p34
    %p36 = scmp.ne.s32.totalorder %s22, %s23
    %p37 = scmp.eq.s32.totalorder %s15, 3
    %p38 = por %p36, %p37
    %p40 = scmp.ne.s32.totalorder %s23, %s39
    %p41 = scmp.eq.s32.totalorder %s15, 0
    %p42 = por %p40, %p41
    %s44 = sadd.s32 %s43, 1
    %p47 = scmp.eq.s32.totalorder %s9, 3
    %p48 = scmp.ne.s32.totalorder %s43, %s45
    %p49 = scmp.eq.s32.totalorder %s9, 0
    %p50 = por %p48, %p49
    %p51 = scmp.ne.s32.totalorder %s43, %s45
    %p52 = scmp.eq.s32.totalorder %s14, 3
    %p53 = por %p51, %p52
    %p54 = scmp.ne.s32.totalorder %s45, %s46
    %p55 = scmp.eq.s32.totalorder %s14, 0
    %p56 = por %p54, %p55
    %p57 = scmp.ne.s32.totalorder %s45, %s46
    %p58 = scmp.eq.s32.totalorder %s15, 3
    %p59 = por %p57, %p58
    %p61 = scmp.ne.s32.totalorder %s46, %s60
    %p62 = scmp.eq.s32.totalorder %s15, 0
    %p63 = por %p61, %p62
    %s65 = sadd.s32 %s64, 1
    %p68 = scmp.eq.s32.totalorder %s9, 3
    %p69 = scmp.ne.s32.totalorder %s64, %s66
    %p70 = scmp.eq.s32.totalorder %s9, 0
    %p71 = por %p69, %p70
    %p72 = scmp.ne.s32.totalorder %s64, %s66
    %p73 = scmp.eq.s32.totalorder %s14, 3
    %p74 = por %p72, %p73
    %p75 = scmp.ne.s32.totalorder %s66, %s67
    %p76 = scmp.eq.s32.totalorder %s14, 0
    %p77 = por %p75, %p76
    %p78 = scmp.ne.s32.totalorder %s66, %s67
    %p79 = scmp.eq.s32.totalorder %s15, 3
    %p80 = por %p78, %p79
    %p82 = scmp.ne.s32.totalorder %s67, %s81
    %p83 = scmp.eq.s32.totalorder %s15, 0
    %p84 = por %p82, %p83
    %s85 = ssub.s32 %s9, %s16
    %p86 = scmp.eq.s32.totalorder %s85, 0
    %s88 = sadd.s32 %s87, 1
    %s89 = scalar_select %p86, %s87, %s88
    %p92 = pneg %p86
    %p93 = scmp.eq.s32.totalorder %s9, 3
    %p94 = por %p92, %p93
    %p95 = scmp.ne.s32.totalorder %s87, %s90
    %p96 = scmp.eq.s32.totalorder %s9, 0
    %p97 = por %p95, %p96
    %p98 = scmp.ne.s32.totalorder %s87, %s90
    %p99 = scmp.eq.s32.totalorder %s14, 3
    %p100 = por %p98, %p99
    %p101 = scmp.ne.s32.totalorder %s90, %s91
    %p102 = scmp.eq.s32.totalorder %s14, 0
    %p103 = por %p101, %p102
    %p104 = scmp.ne.s32.totalorder %s90, %s91
    %p105 = scmp.eq.s32.totalorder %s15, 3
    %p106 = por %p104, %p105
    %p108 = scmp.ne.s32.totalorder %s91, %s107
    %p109 = scmp.eq.s32.totalorder %s15, 0
    %p110 = por %p108, %p109
    %p111 = scmp.le.s32.totalorder 1, %s9
    %p112 = scmp.lt.s32.totalorder %s9, 5
    %p113 = pnand %p111, %p112
    %p114 = pneg %p113
    // Predicated region
    $region9: #{inception_z_forward.2} parent=5 // pred_check
      _
    $region10: #{inception_z_forward.2} parent=5 // pred_check_branch
      %116 = sbr.rel (%p113) target = $region12
    $region11: #{inception_z_forward.2} parent=5 // pred_region
      %s117 = ssub.s32 %s9, 1
      // Predicated region
      $region13: #{inception_z_forward.2} parent=11 // pred_check
        %p118 = pneg %p56
      $region14: #{inception_z_forward.2} parent=11 // pred_check_branch
        %120 = sbr.rel (%p118) target = $region16
      $region15: #{inception_z_forward.2} parent=11 // pred_region
        _
      $region16: #{inception_z_forward.2} parent=11 // pred_fallthru
        _
      // Predicated region
      $region17: #{inception_z_forward.2} parent=11 // pred_check
        %p121 = pneg %p77
      $region18: #{inception_z_forward.2} parent=11 // pred_check_branch
        %123 = sbr.rel (%p121) target = $region20
      $region19: #{inception_z_forward.2} parent=11 // pred_region
        _
      $region20: #{inception_z_forward.2} parent=11 // pred_fallthru
        _
    $region12: #{inception_z_forward.2} parent=5 // pred_fallthru
      _
    %p124 = scmp.lt.s32.totalorder %s9, 4
    // Predicated region
    $region21: #{inception_z_forward.2} parent=5 // pred_check
      %p125 = pneg %p124
    $region22: #{inception_z_forward.2} parent=5 // pred_check_branch
      %127 = sbr.rel (%p125) target = $region24
    $region23: #{inception_z_forward.2} parent=5 // pred_region
      // Predicated region
      $region25: #{inception_z_forward.2} parent=23 // pred_check
        %p128 = pneg %p29
      $region26: #{inception_z_forward.2} parent=23 // pred_check_branch
        %130 = sbr.rel (%p128) target = $region28
      $region27: #{inception_z_forward.2} parent=23 // pred_region
        %s131 = smul.u32 4, %s9
        %p132 = scmp.lt.s32.totalorder %s131, 15
        %s133 = scalar_select %p132, %s131, 15
        %s134 = smul.addr %s133, 4
        %s135 = scalar_lea.vmem %s0, %s134
        %s136 = smul.u32 4, %s9
      $region28: #{inception_z_forward.2} parent=23 // pred_fallthru
        _
    $region24: #{inception_z_forward.2} parent=5 // pred_fallthru
      _
    %p137 = scmp.le.s32.totalorder 1, %s9
    %p138 = scmp.lt.s32.totalorder %s9, 5
    %p139 = pnand %p137, %p138
    %p140 = pneg %p139
    // Predicated region
    $region29: #{inception_z_forward.2} parent=5 // pred_check
      _
    $region30: #{inception_z_forward.2} parent=5 // pred_check_branch
      %142 = sbr.rel (%p139) target = $region32
    $region31: #{inception_z_forward.2} parent=5 // pred_region
      %s143 = ssub.s32 %s9, 1
      %s144 = smul.u32 4, %s14
      %p145 = scmp.lt.s32.totalorder %s144, 15
      %s146 = scalar_select %p145, %s144, 15
      %s147 = smul.addr %s146, 4
      %s148 = scalar_lea.vmem %s0, %s147
      %p149 = pneg %p35
      %p150 = pneg %p32
      %p151 = pneg %p56
      %p152 = pneg %p53
      %p153 = pneg %p77
      %p154 = pneg %p74
      %p155 = pneg %p103
      %p156 = pneg %p100
      %s157 = smul.u32 4, %s14
      %p158 = scmp.lt.s32.totalorder %s157, 15
      %s159 = scalar_select %p158, %s157, 15
      %s160 = smul.addr %s159, 4
      %s161 = scalar_lea.vmem %s3, %s160
      %s162 = smul.u32 4, %s14
      %p163 = scmp.lt.s32.totalorder %s162, 15
      %s164 = scalar_select %p163, %s162, 15
      %s165 = smul.addr %s164, 4
      %s166 = scalar_lea.vmem %s0, %s165
      %s167 = smul.u32 4, %s14
      %s168 = smul.u32 4, %s14
      %p169 = scmp.lt.s32.totalorder %s168, 15
      %s170 = scalar_select %p169, %s168, 15
      %s171 = smul.addr %s170, 4
      %s172 = scalar_lea.vmem %s3, %s171
      %s173 = smul.u32 4, %s14
      %v175 = vld [vmem:[%s166] sm:$0xf]
      %v176 = vld [vmem:[%s166 + $0x4] sm:$0xf]
      %v177 = vld [vmem:[%s166 + $0x8] sm:$0xf]
      %v178 = vld [vmem:[%s166 + $0xc] sm:$0xf]
      %v179 = vld [vmem:[%s1] sm:$0xf]
      %v180 = vld [vmem:[%s1 + $0x4] sm:$0xf]
      %v181 = vld [vmem:[%s1 + $0x8] sm:$0xf]
      %v182 = vld [vmem:[%s1 + $0xc] sm:$0xf]
      %v183 = vld [vmem:[%s1 + $0x10] sm:$0x3]
      %v184 = vld [vmem:[%s2] sm:$0x1]
      %v186 = vlaneseq
      %v187 = vshrl.u32 %v186, 7
      %v188 = vsub.s32 0, %v187
      %v189 = vrot.slane %v184, %v188
      %v195 = vunpack.c.l.b16 %v175
      %v196 = vunpack.c.l.b16 %v176
      %v197 = vunpack.c.l.b16 %v177
      %v198 = vunpack.c.l.b16 %v178
      %v199 = vpack.c.b16 %v196, %v195
      %v200 = vpack.c.b16 %v198, %v197
      %v206 = vunpack.c.l.b16 %v179
      %v207 = vunpack.c.l.b16 %v180
      %v208 = vunpack.c.l.b16 %v181
      %v209 = vunpack.c.l.b16 %v182
      %v210 = vunpack.c.l.b16 %v183
      %v211 = vpack.c.b16 %v207, %v206
      %v212 = vpack.c.b16 %v209, %v208
      %v213 = vpack.c.b16 %v210, %v210
      %vm216 = vcmask 293888
      %v218 = vsel %vm216, %v199, 0
      %v221 = vsel %vm216, %v200, 0
      %vm223 = vcmask 1041408
      %v225 = vsel %vm223, %v213, 0
      %227 = vmatprep.subr.bf16.mxu0 0
      %228 = vmatpush1.bf16.msra.mxu0 0
      %229 = vmatprep.subr.bf16.mxu0 0
      %230 = vmatpush1.bf16.msra.mxu0 0
      %231 = vmatprep.subr.bf16.mxu0 0
      %232 = vmatpush1.bf16.msra.mxu0 0
      %233 = vmatprep.subr.bf16.mxu0 0
      %234 = vmatpush1.bf16.msra.mxu0 0
      %235 = vmatprep.subr.bf16.mxu0 0
      %236 = vmatpush1.bf16.msra.mxu0 0
      %237 = vmatprep.subr.bf16.mxu0 0
      %238 = vmatpush1.bf16.msra.mxu0 %v225
      %239 = vmatprep.subr.bf16.mxu0 0
      %240 = vmatpush1.bf16.msra.mxu0 %v212
      %241 = vmatprep.subr.bf16.mxu0 0
      %242 = vmatpush1.bf16.msra.mxu0 %v211
      %243 = vmatprep.subr.bf16.mxu0 0
      %244 = vmatpush2.bf16.msra.mxu0 0
      %245 = vmatprep.subr.bf16.mxu0 0
      %246 = vmatpush2.bf16.msra.mxu0 0
      %247 = vmatprep.subr.bf16.mxu0 0
      %248 = vmatpush2.bf16.msra.mxu0 0
      %249 = vmatprep.subr.bf16.mxu0 0
      %250 = vmatpush2.bf16.msra.mxu0 0
      %251 = vmatprep.subr.bf16.mxu0 0
      %252 = vmatpush2.bf16.msra.mxu0 0
      %253 = vmatprep.subr.bf16.mxu0 0
      %254 = vmatpush2.bf16.msra.mxu0 0
      %255 = vmatprep.subr.bf16.mxu0 0
      %256 = vmatpush2.bf16.msra.mxu0 0
      %257 = vmatprep.subr.bf16.mxu0 0
      %258 = vmatpush2.bf16.msra.mxu0 0
      %259 = vmatprep.mubr.bf16.mxu0 0
      %260 = vmatmul.mubr.bf16.gmra.mxu0 %v218
      %v261 = vpop.f32.mrf.mxu0
      %v262 = vadd.f32 %v189, %v261
      %v263 = vpop.f32.mrf.mxu0
      %v264 = vpop.f32.mrf.mxu0
      %v265 = vadd.f32 %v189, %v264
      %v266 = vpop.f32.mrf.mxu0
      %267 = vmatprep.mubr.bf16.mxu0 0
      %268 = vmatmul.mubr.bf16.gmra.mxu0 %v221
      %v269 = vpop.f32.mrf.mxu0
      %v270 = vadd.f32 %v189, %v269
      %v271 = vpop.f32.mrf.mxu0
      %v272 = vpop.f32.mrf.mxu0
      %v273 = vadd.f32 %v189, %v272
      %v274 = vpop.f32.mrf.mxu0
      %275 = vdwg.mxu0
      %v276 = vmax.f32 %v262, 0.0
      %v277 = vmax.f32 %v265, 0.0
      %v278 = vmax.f32 %v270, 0.0
      %v279 = vmax.f32 %v273, 0.0
      %v280 = vpack.c.bf16 %v277, %v276
      %v281 = vpack.c.bf16 %v279, %v278
      %v284 = vunpack.c.l.b16 %v280
      %v285 = vunpack.c.h.b16 %v280
      %v286 = vunpack.c.l.b16 %v281
      %v287 = vunpack.c.h.b16 %v281
      %v288 = vpack.c.b16 %v284, %v284
      %v289 = vpack.c.b16 %v285, %v285
      %v290 = vpack.c.b16 %v286, %v286
      %v291 = vpack.c.b16 %v287, %v287
      %296 = vst [vmem:[%s172] sm:$0xf] %v288
      %297 = vst [vmem:[%s172 + $0x4] sm:$0xf] %v289
      %298 = vst [vmem:[%s172 + $0x8] sm:$0xf] %v290
      %299 = vst [vmem:[%s172 + $0xc] sm:$0xf] %v291
      %s300 = smul.u32 4, %s14
      %p301 = scmp.lt.s32.totalorder %s300, 15
      %s302 = scalar_select %p301, %s300, 15
      %s303 = smul.addr %s302, 4
      %s304 = scalar_lea.vmem %s3, %s303
      // Predicated region
      $region33: #{inception_z_forward.2} parent=31 // pred_check
        %p305 = pneg %p100
      $region34: #{inception_z_forward.2} parent=31 // pred_check_branch
        %307 = sbr.rel (%p305) target = $region36
      $region35: #{inception_z_forward.2} parent=31 // pred_region
        %s308 = smul.u32 4, %s14
      $region36: #{inception_z_forward.2} parent=31 // pred_fallthru
        _
    $region32: #{inception_z_forward.2} parent=5 // pred_fallthru
      _
    %p309 = scmp.le.s32.totalorder 2, %s9
    // Predicated region
    $region37: #{inception_z_forward.2} parent=5 // pred_check
      %p310 = pneg %p309
    $region38: #{inception_z_forward.2} parent=5 // pred_check_branch
      %312 = sbr.rel (%p310) target = $region40
    $region39: #{inception_z_forward.2} parent=5 // pred_region
      %s313 = ssub.s32 %s9, 2
      // Predicated region
      $region41: #{inception_z_forward.2} parent=39 // pred_check
        %p314 = pneg %p106
      $region42: #{inception_z_forward.2} parent=39 // pred_check_branch
        %316 = sbr.rel (%p314) target = $region44
      $region43: #{inception_z_forward.2} parent=39 // pred_region
        %s317 = smul.u32 4, %s15
        %p318 = scmp.lt.s32.totalorder %s317, 15
        %s319 = scalar_select %p318, %s317, 15
        %s320 = smul.addr %s319, 4
        %s321 = scalar_lea.vmem %s3, %s320
      $region44: #{inception_z_forward.2} parent=39 // pred_fallthru
        _
    $region40: #{inception_z_forward.2} parent=5 // pred_fallthru
      _
  $region6: #{inception_z_forward.2} parent=0 // loop_footer
    %s13 = sadd.s32 1, %s9
  $region7: #{inception_z_forward.2} parent=0 // loop_footer_branch
    %8 = sbr.rel target = $region3
  $region8: #{inception_z_forward.2} parent=0 // loop_exit
    _

// kernel: inception_z_forward.3
$region0: #{inception_z_forward.3}
  #allocation0 [shape = 'u32[]', space=smem, size = 0x4, offset = 0x4, fixed_abs, tag = 'smem constant byte address 0x4 - core index']
  #allocation1 [shape = 'u32[144,128]{1,0:T(1,128)}', space=vmem, size = 0x12000, scoped, tag = 'internal scratch']
  %s0 = inlined_call_operand.vmem [shape: bf16[128,576], index: 0, kind: input, shape index: {}]
  %s1 = inlined_call_operand.vmem [shape: bf16[128,196], index: 1, kind: input, shape index: {}]
  %s2 = inlined_call_operand.vmem [shape: bf16[576,128], index: 2, kind: input, shape index: {}]
  %s3 = inlined_call_operand.vmem [shape: bf16[196,128], index: 3, kind: input, shape index: {}]
  %s4 = inlined_call_operand.vmem [shape: f32[1,128], index: 4, kind: input, shape index: {}]
  %s5 = inlined_call_operand.hbm [shape: f32[128,128], index: 5, kind: output, shape index: {}]
  %s6 = sld [smem:[#allocation0]]
  $region53: #{inception_z_forward.3} parent=0
    _
  %s8 = ssub.s32 1, %s6
  %s9 = scalar_select 0, %s8, %s6
  $region1: #{inception_z_forward.3} parent=0
    #allocation2 [shape = 'u8[32768]{0}', space=vmem, size = 0x8000, scoped, tag = 'output window, operand 0']
    #allocation3 [shape = 's32[2]{0}', space=sflag, size = 0x8, scoped, tag = 'scoped memory for inception_z_forward.3']
    %10 = vsyncpa [#allocation3], 0
    %s11 = scalar_lea.sflag [#allocation3], 1
    %12 = vsyncpa %s11, 0
    loop: start=0, step=1, limit=6
    $region2: #{inception_z_forward.3} parent=1 // loop_pre_header
      _
    $region3: #{inception_z_forward.3} parent=1 // loop_header
      %s14 = sphi 0, %s18
      %p15 = scmp.ge.s32.totalorder %s14, 6
      %s24 = sphi 0, %s26
      %s27 = sphi 0, %s24
      %s28 = sphi 0, %s27
      %s44 = sphi 0, %s28
      %s50 = sphi 0, %s52
      %s53 = sphi 0, %s50
      %s54 = sphi 0, %s53
      %s70 = sphi 0, %s54
      %s74 = sphi 0, %s74
      %s76 = sphi 0, %s74
      %s77 = sphi 0, %s76
      %s91 = sphi 0, %s77
      %s95 = sphi 0, %s95
      %s97 = sphi 0, %s95
      %s98 = sphi 0, %s97
      %s112 = sphi 0, %s98
      %s116 = sphi 0, %s116
      %s118 = sphi 0, %s116
      %s119 = sphi 0, %s118
      %s133 = sphi 0, %s119
      %s139 = sphi 0, %s141
      %s142 = sphi 0, %s139
      %s143 = sphi 0, %s142
      %s159 = sphi 0, %s143
    $region4: #{inception_z_forward.3} parent=1 // loop_header_branch
      %17 = sbr.rel (%p15) target = $region8
    $region5: #{inception_z_forward.3} parent=1 // loop_body
      %s19 = ssub.s32 %s14, 1
      %s20 = ssub.s32 %s14, 2
      %s21 = sadd.s32 %s14, 1
      %s22 = ssub.s32 %s14, %s21
      %p23 = scmp.eq.s32.totalorder %s22, 0
      %s25 = sadd.s32 %s24, 1
      %s26 = scalar_select %p23, %s24, %s25
      %p29 = pneg %p23
      %p30 = scmp.eq.s32.totalorder %s14, 3
      %p31 = por %p29, %p30
      %p32 = scmp.ne.s32.totalorder %s24, %s27
      %p33 = scmp.eq.s32.totalorder %s14, 0
      %p34 = por %p32, %p33
      %p35 = scmp.ne.s32.totalorder %s24, %s27
      %p36 = scmp.eq.s32.totalorder %s19, 3
      %p37 = por %p35, %p36
      %p38 = scmp.ne.s32.totalorder %s27, %s28
      %p39 = scmp.eq.s32.totalorder %s19, 0
      %p40 = por %p38, %p39
      %p41 = scmp.ne.s32.totalorder %s27, %s28
      %p42 = scmp.eq.s32.totalorder %s20, 3
      %p43 = por %p41, %p42
      %p45 = scmp.ne.s32.totalorder %s28, %s44
      %p46 = scmp.eq.s32.totalorder %s20, 0
      %p47 = por %p45, %p46
      %s48 = ssub.s32 %s14, %s21
      %p49 = scmp.eq.s32.totalorder %s48, 0
      %s51 = sadd.s32 %s50, 1
      %s52 = scalar_select %p49, %s50, %s51
      %p55 = pneg %p49
      %p56 = scmp.eq.s32.totalorder %s14, 3
      %p57 = por %p55, %p56
      %p58 = scmp.ne.s32.totalorder %s50, %s53
      %p59 = scmp.eq.s32.totalorder %s14, 0
      %p60 = por %p58, %p59
      %p61 = scmp.ne.s32.totalorder %s50, %s53
      %p62 = scmp.eq.s32.totalorder %s19, 3
      %p63 = por %p61, %p62
      %p64 = scmp.ne.s32.totalorder %s53, %s54
      %p65 = scmp.eq.s32.totalorder %s19, 0
      %p66 = por %p64, %p65
      %p67 = scmp.ne.s32.totalorder %s53, %s54
      %p68 = scmp.eq.s32.totalorder %s20, 3
      %p69 = por %p67, %p68
      %p71 = scmp.ne.s32.totalorder %s54, %s70
      %p72 = scmp.eq.s32.totalorder %s20, 0
      %p73 = por %p71, %p72
      %s75 = sadd.s32 %s74, 1
      %p78 = scmp.eq.s32.totalorder %s14, 3
      %p79 = scmp.ne.s32.totalorder %s74, %s76
      %p80 = scmp.eq.s32.totalorder %s14, 0
      %p81 = por %p79, %p80
      %p82 = scmp.ne.s32.totalorder %s74, %s76
      %p83 = scmp.eq.s32.totalorder %s19, 3
      %p84 = por %p82, %p83
      %p85 = scmp.ne.s32.totalorder %s76, %s77
      %p86 = scmp.eq.s32.totalorder %s19, 0
      %p87 = por %p85, %p86
      %p88 = scmp.ne.s32.totalorder %s76, %s77
      %p89 = scmp.eq.s32.totalorder %s20, 3
      %p90 = por %p88, %p89
      %p92 = scmp.ne.s32.totalorder %s77, %s91
      %p93 = scmp.eq.s32.totalorder %s20, 0
      %p94 = por %p92, %p93
      %s96 = sadd.s32 %s95, 1
      %p99 = scmp.eq.s32.totalorder %s14, 3
      %p100 = scmp.ne.s32.totalorder %s95, %s97
      %p101 = scmp.eq.s32.totalorder %s14, 0
      %p102 = por %p100, %p101
      %p103 = scmp.ne.s32.totalorder %s95, %s97
      %p104 = scmp.eq.s32.totalorder %s19, 3
      %p105 = por %p103, %p104
      %p106 = scmp.ne.s32.totalorder %s97, %s98
      %p107 = scmp.eq.s32.totalorder %s19, 0
      %p108 = por %p106, %p107
      %p109 = scmp.ne.s32.totalorder %s97, %s98
      %p110 = scmp.eq.s32.totalorder %s20, 3
      %p111 = por %p109, %p110
      %p113 = scmp.ne.s32.totalorder %s98, %s112
      %p114 = scmp.eq.s32.totalorder %s20, 0
      %p115 = por %p113, %p114
      %s117 = sadd.s32 %s116, 1
      %p120 = scmp.eq.s32.totalorder %s14, 3
      %p121 = scmp.ne.s32.totalorder %s116, %s118
      %p122 = scmp.eq.s32.totalorder %s14, 0
      %p123 = por %p121, %p122
      %p124 = scmp.ne.s32.totalorder %s116, %s118
      %p125 = scmp.eq.s32.totalorder %s19, 3
      %p126 = por %p124, %p125
      %p127 = scmp.ne.s32.totalorder %s118, %s119
      %p128 = scmp.eq.s32.totalorder %s19, 0
      %p129 = por %p127, %p128
      %p130 = scmp.ne.s32.totalorder %s118, %s119
      %p131 = scmp.eq.s32.totalorder %s20, 3
      %p132 = por %p130, %p131
      %p134 = scmp.ne.s32.totalorder %s119, %s133
      %p135 = scmp.eq.s32.totalorder %s20, 0
      %p136 = por %p134, %p135
      %s137 = ssub.s32 %s14, %s21
      %p138 = scmp.eq.s32.totalorder %s137, 0
      %s140 = sadd.s32 %s139, 1
      %s141 = scalar_select %p138, %s139, %s140
      %p144 = pneg %p138
      %p145 = scmp.eq.s32.totalorder %s14, 3
      %p146 = por %p144, %p145
      %p147 = scmp.ne.s32.totalorder %s139, %s142
      %p148 = scmp.eq.s32.totalorder %s14, 0
      %p149 = por %p147, %p148
      %p150 = scmp.ne.s32.totalorder %s139, %s142
      %p151 = scmp.eq.s32.totalorder %s19, 3
      %p152 = por %p150, %p151
      %p153 = scmp.ne.s32.totalorder %s142, %s143
      %p154 = scmp.eq.s32.totalorder %s19, 0
      %p155 = por %p153, %p154
      %p156 = scmp.ne.s32.totalorder %s142, %s143
      %p157 = scmp.eq.s32.totalorder %s20, 3
      %p158 = por %p156, %p157
      %p160 = scmp.ne.s32.totalorder %s143, %s159
      %p161 = scmp.eq.s32.totalorder %s20, 0
      %p162 = por %p160, %p161
      %p163 = scmp.le.s32.totalorder 1, %s14
      %p164 = scmp.lt.s32.totalorder %s14, 5
      %p165 = pnand %p163, %p164
      %p166 = pneg %p165
      // Predicated region
      $region9: #{inception_z_forward.3} parent=5 // pred_check
        _
      $region10: #{inception_z_forward.3} parent=5 // pred_check_branch
        %168 = sbr.rel (%p165) target = $region12
      $region11: #{inception_z_forward.3} parent=5 // pred_region
        %s169 = ssub.s32 %s14, 1
        // Predicated region
        $region13: #{inception_z_forward.3} parent=11 // pred_check
          %p170 = pneg %p87
        $region14: #{inception_z_forward.3} parent=11 // pred_check_branch
          %172 = sbr.rel (%p170) target = $region16
        $region15: #{inception_z_forward.3} parent=11 // pred_region
          _
        $region16: #{inception_z_forward.3} parent=11 // pred_fallthru
          _
        // Predicated region
        $region17: #{inception_z_forward.3} parent=11 // pred_check
          %p173 = pneg %p108
        $region18: #{inception_z_forward.3} parent=11 // pred_check_branch
          %175 = sbr.rel (%p173) target = $region20
        $region19: #{inception_z_forward.3} parent=11 // pred_region
          _
        $region20: #{inception_z_forward.3} parent=11 // pred_fallthru
          _
        // Predicated region
        $region21: #{inception_z_forward.3} parent=11 // pred_check
          %p176 = pneg %p129
        $region22: #{inception_z_forward.3} parent=11 // pred_check_branch
          %178 = sbr.rel (%p176) target = $region24
        $region23: #{inception_z_forward.3} parent=11 // pred_region
          _
        $region24: #{inception_z_forward.3} parent=11 // pred_fallthru
          _
      $region12: #{inception_z_forward.3} parent=5 // pred_fallthru
        _
      %p179 = scmp.lt.s32.totalorder %s14, 4
      // Predicated region
      $region25: #{inception_z_forward.3} parent=5 // pred_check
        %p180 = pneg %p179
      $region26: #{inception_z_forward.3} parent=5 // pred_check_branch
        %182 = sbr.rel (%p180) target = $region28
      $region27: #{inception_z_forward.3} parent=5 // pred_region
        // Predicated region
        $region29: #{inception_z_forward.3} parent=27 // pred_check
          %p183 = pneg %p34
        $region30: #{inception_z_forward.3} parent=27 // pred_check_branch
          %185 = sbr.rel (%p183) target = $region32
        $region31: #{inception_z_forward.3} parent=27 // pred_region
          %s186 = smul.u32 4, %s14
          %p187 = scmp.lt.s32.totalorder %s186, 15
          %s188 = scalar_select %p187, %s186, 15
          %s189 = smul.addr %s188, 5
          %s190 = smul.addr %s189, 4
          %s191 = scalar_lea.vmem %s0, %s190
          %s192 = smul.u32 4, %s14
        $region32: #{inception_z_forward.3} parent=27 // pred_fallthru
          _
        // Predicated region
        $region33: #{inception_z_forward.3} parent=27 // pred_check
          %p193 = pneg %p60
        $region34: #{inception_z_forward.3} parent=27 // pred_check_branch
          %195 = sbr.rel (%p193) target = $region36
        $region35: #{inception_z_forward.3} parent=27 // pred_region
          %s196 = smul.u32 4, %s14
          %p197 = scmp.lt.s32.totalorder %s196, 15
          %s198 = scalar_select %p197, %s196, 15
          %s199 = smul.addr %s198, 2
          %s200 = smul.addr %s199, 4
          %s201 = scalar_lea.vmem %s1, %s200
          %s202 = smul.u32 4, %s14
        $region36: #{inception_z_forward.3} parent=27 // pred_fallthru
          _
      $region28: #{inception_z_forward.3} parent=5 // pred_fallthru
        _
      %p203 = scmp.le.s32.totalorder 1, %s14
      %p204 = scmp.lt.s32.totalorder %s14, 5
      %p205 = pnand %p203, %p204
      %p206 = pneg %p205
      // Predicated region
      $region37: #{inception_z_forward.3} parent=5 // pred_check
        _
      $region38: #{inception_z_forward.3} parent=5 // pred_check_branch
        %208 = sbr.rel (%p205) target = $region40
      $region39: #{inception_z_forward.3} parent=5 // pred_region
        %s209 = ssub.s32 %s14, 1
        %s210 = smul.u32 4, %s19
        %p211 = scmp.lt.s32.totalorder %s210, 15
        %s212 = scalar_select %p211, %s210, 15
        %s213 = smul.addr %s212, 5
        %s214 = smul.addr %s213, 4
        %s215 = scalar_lea.vmem %s0, %s214
        %p216 = pneg %p40
        %p217 = pneg %p37
        %s218 = smul.u32 4, %s19
        %p219 = scmp.lt.s32.totalorder %s218, 15
        %s220 = scalar_select %p219, %s218, 15
        %s221 = smul.addr %s220, 2
        %s222 = smul.addr %s221, 4
        %s223 = scalar_lea.vmem %s1, %s222
        %p224 = pneg %p66
        %p225 = pneg %p63
        %p226 = pneg %p87
        %p227 = pneg %p84
        %p228 = pneg %p108
        %p229 = pneg %p105
        %p230 = pneg %p129
        %p231 = pneg %p126
        %p232 = pneg %p155
        %p233 = pneg %p152
        %s234 = sand.u32 %s142, 1
        %s235 = scalar_lea.sflag [#allocation3], %s234
        %s236 = sand.u32 %s142, 1
        %s237 = smul.addr %s236, 32
        %s238 = scalar_lea.vmem [#allocation2], %s237
        %s239 = smul.u32 4, %s19
        %p240 = scmp.lt.s32.totalorder %s239, 15
        %s241 = scalar_select %p240, %s239, 15
        %s242 = smul.addr %s241, 5
        %s243 = smul.addr %s242, 4
        %s244 = scalar_lea.vmem %s0, %s243
        %s245 = smul.u32 4, %s19
        %s246 = smul.u32 4, %s19
        %p247 = scmp.lt.s32.totalorder %s246, 15
        %s248 = scalar_select %p247, %s246, 15
        %s249 = smul.addr %s248, 2
        %s250 = smul.addr %s249, 4
        %s251 = scalar_lea.vmem %s1, %s250
        %s252 = smul.u32 4, %s19
        %s253 = smul.u32 4, %s19
        %v255 = vld [vmem:[%s244] sm:$0xff]
        %v256 = vld [vmem:[%s244 + $0x8] sm:$0xff]
        %v257 = vld [vmem:[%s244 + $0x10] sm:$0xf]
        %v258 = vld [vmem:[%s244 + $0x14] sm:$0xff]
        %v259 = vld [vmem:[%s244 + $0x1c] sm:$0xff]
        %v260 = vld [vmem:[%s244 + $0x24] sm:$0xf]
        %v261 = vld [vmem:[%s244 + $0x28] sm:$0xff]
        %v262 = vld [vmem:[%s244 + $0x30] sm:$0xff]
        %v263 = vld [vmem:[%s244 + $0x38] sm:$0xf]
        %v264 = vld [vmem:[%s244 + $0x3c] sm:$0xff]
        %v265 = vld [vmem:[%s244 + $0x44] sm:$0xff]
        %v266 = vld [vmem:[%s244 + $0x4c] sm:$0xf]
        %v267 = vld [vmem:[%s2] sm:$0xf]
        %v268 = vld [vmem:[%s2 + $0x4] sm:$0xf]
        %v269 = vld [vmem:[%s2 + $0x8] sm:$0xf]
        %v270 = vld [vmem:[%s2 + $0xc] sm:$0xf]
        %v271 = vld [vmem:[%s2 + $0x10] sm:$0xf]
        %v272 = vld [vmem:[%s2 + $0x14] sm:$0xf]
        %v273 = vld [vmem:[%s2 + $0x18] sm:$0xf]
        %v274 = vld [vmem:[%s2 + $0x1c] sm:$0xf]
        %v275 = vld [vmem:[%s2 + $0x20] sm:$0xf]
        %v276 = vld [vmem:[%s2 + $0x24] sm:$0xf]
        %v277 = vld [vmem:[%s2 + $0x28] sm:$0xf]
        %v278 = vld [vmem:[%s2 + $0x2c] sm:$0xf]
        %v279 = vld [vmem:[%s2 + $0x30] sm:$0xf]
        %v280 = vld [vmem:[%s2 + $0x34] sm:$0xf]
        %v281 = vld [vmem:[%s2 + $0x38] sm:$0xf]
        %v282 = vld [vmem:[%s2 + $0x3c] sm:$0xf]
        %v283 = vld [vmem:[%s2 + $0x40] sm:$0xf]
        %v284 = vld [vmem:[%s2 + $0x44] sm:$0xf]
        %v285 = vld [vmem:[%s2 + $0x48] sm:$0xf]
        %v286 = vld [vmem:[%s2 + $0x4c] sm:$0xf]
        %v287 = vld [vmem:[%s2 + $0x50] sm:$0xf]
        %v288 = vld [vmem:[%s2 + $0x54] sm:$0xf]
        %v289 = vld [vmem:[%s2 + $0x58] sm:$0xf]
        %v290 = vld [vmem:[%s2 + $0x5c] sm:$0xf]
        %v291 = vld [vmem:[%s2 + $0x60] sm:$0xf]
        %v292 = vld [vmem:[%s2 + $0x64] sm:$0xf]
        %v293 = vld [vmem:[%s2 + $0x68] sm:$0xf]
        %v294 = vld [vmem:[%s2 + $0x6c] sm:$0xf]
        %v295 = vld [vmem:[%s2 + $0x70] sm:$0xf]
        %v296 = vld [vmem:[%s2 + $0x74] sm:$0xf]
        %v297 = vld [vmem:[%s2 + $0x78] sm:$0xf]
        %v298 = vld [vmem:[%s2 + $0x7c] sm:$0xf]
        %v299 = vld [vmem:[%s2 + $0x80] sm:$0xf]
        %v300 = vld [vmem:[%s2 + $0x84] sm:$0xf]
        %v301 = vld [vmem:[%s2 + $0x88] sm:$0xf]
        %v302 = vld [vmem:[%s2 + $0x8c] sm:$0xf]
        %v303 = vld [vmem:[%s2 + $0x90] sm:$0xf]
        %v304 = vld [vmem:[%s2 + $0x94] sm:$0xf]
        %v305 = vld [vmem:[%s2 + $0x98] sm:$0xf]
        %v306 = vld [vmem:[%s2 + $0x9c] sm:$0xf]
        %v307 = vld [vmem:[%s2 + $0xa0] sm:$0xf]
        %v308 = vld [vmem:[%s2 + $0xa4] sm:$0xf]
        %v309 = vld [vmem:[%s2 + $0xa8] sm:$0xf]
        %v310 = vld [vmem:[%s2 + $0xac] sm:$0xf]
        %v311 = vld [vmem:[%s2 + $0xb0] sm:$0xf]
        %v312 = vld [vmem:[%s2 + $0xb4] sm:$0xf]
        %v313 = vld [vmem:[%s2 + $0xb8] sm:$0xf]
        %v314 = vld [vmem:[%s2 + $0xbc] sm:$0xf]
        %v315 = vld [vmem:[%s2 + $0xc0] sm:$0xf]
        %v316 = vld [vmem:[%s2 + $0xc4] sm:$0xf]
        %v317 = vld [vmem:[%s2 + $0xc8] sm:$0xf]
        %v318 = vld [vmem:[%s2 + $0xcc] sm:$0xf]
        %v319 = vld [vmem:[%s2 + $0xd0] sm:$0xf]
        %v320 = vld [vmem:[%s2 + $0xd4] sm:$0xf]
        %v321 = vld [vmem:[%s2 + $0xd8] sm:$0xf]
        %v322 = vld [vmem:[%s2 + $0xdc] sm:$0xf]
        %v323 = vld [vmem:[%s2 + $0xe0] sm:$0xf]
        %v324 = vld [vmem:[%s2 + $0xe4] sm:$0xf]
        %v325 = vld [vmem:[%s2 + $0xe8] sm:$0xf]
        %v326 = vld [vmem:[%s2 + $0xec] sm:$0xf]
        %v327 = vld [vmem:[%s2 + $0xf0] sm:$0xf]
        %v328 = vld [vmem:[%s2 + $0xf4] sm:$0xf]
        %v329 = vld [vmem:[%s2 + $0xf8] sm:$0xf]
        %v330 = vld [vmem:[%s2 + $0xfc] sm:$0xf]
        %v331 = vld [vmem:[%s2 + $0x100] sm:$0xf]
        %v332 = vld [vmem:[%s2 + $0x104] sm:$0xf]
        %v333 = vld [vmem:[%s2 + $0x108] sm:$0xf]
        %v334 = vld [vmem:[%s2 + $0x10c] sm:$0xf]
        %v335 = vld [vmem:[%s2 + $0x110] sm:$0xf]
        %v336 = vld [vmem:[%s2 + $0x114] sm:$0xf]
        %v337 = vld [vmem:[%s2 + $0x118] sm:$0xf]
        %v338 = vld [vmem:[%s2 + $0x11c] sm:$0xf]
        %v339 = vld [vmem:[%s251] sm:$0xff]
        %v340 = vld [vmem:[%s251 + $0x8] sm:$0xff]
        %v341 = vld [vmem:[%s251 + $0x10] sm:$0xff]
        %v342 = vld [vmem:[%s251 + $0x18] sm:$0xff]
        %v343 = vld [vmem:[%s3] sm:$0xf]
        %v344 = vld [vmem:[%s3 + $0x4] sm:$0xf]
        %v345 = vld [vmem:[%s3 + $0x8] sm:$0xf]
        %v346 = vld [vmem:[%s3 + $0xc] sm:$0xf]
        %v347 = vld [vmem:[%s3 + $0x10] sm:$0xf]
        %v348 = vld [vmem:[%s3 + $0x14] sm:$0xf]
        %v349 = vld [vmem:[%s3 + $0x18] sm:$0xf]
        %v350 = vld [vmem:[%s3 + $0x1c] sm:$0xf]
        %v351 = vld [vmem:[%s3 + $0x20] sm:$0xf]
        %v352 = vld [vmem:[%s3 + $0x24] sm:$0xf]
        %v353 = vld [vmem:[%s3 + $0x28] sm:$0xf]
        %v354 = vld [vmem:[%s3 + $0x2c] sm:$0xf]
        %v355 = vld [vmem:[%s3 + $0x30] sm:$0xf]
        %v356 = vld [vmem:[%s3 + $0x34] sm:$0xf]
        %v357 = vld [vmem:[%s3 + $0x38] sm:$0xf]
        %v358 = vld [vmem:[%s3 + $0x3c] sm:$0xf]
        %v359 = vld [vmem:[%s3 + $0x40] sm:$0xf]
        %v360 = vld [vmem:[%s3 + $0x44] sm:$0xf]
        %v361 = vld [vmem:[%s3 + $0x48] sm:$0xf]
        %v362 = vld [vmem:[%s3 + $0x4c] sm:$0xf]
        %v363 = vld [vmem:[%s3 + $0x50] sm:$0xf]
        %v364 = vld [vmem:[%s3 + $0x54] sm:$0xf]
        %v365 = vld [vmem:[%s3 + $0x58] sm:$0xf]
        %v366 = vld [vmem:[%s3 + $0x5c] sm:$0xf]
        %v367 = vld [vmem:[%s3 + $0x60] sm:$0x3]
        %v372 = vunpack.c.l.b16 %v339
        %v373 = vunpack.c.h.b16 %v339
        %v374 = vunpack.c.l.b16 %v340
        %v375 = vunpack.c.h.b16 %v340
        %v376 = vunpack.c.l.b16 %v341
        %v377 = vunpack.c.h.b16 %v341
        %v378 = vunpack.c.l.b16 %v342
        %v379 = vunpack.c.h.b16 %v342
        %v380 = vpack.c.b16 %v374, %v372
        %v381 = vpack.c.b16 %v375, %v373
        %v382 = vpack.c.b16 %v378, %v376
        %v383 = vpack.c.b16 %v379, %v377
        %v411 = vunpack.c.l.b16 %v343
        %v412 = vunpack.c.l.b16 %v344
        %v413 = vunpack.c.l.b16 %v345
        %v414 = vunpack.c.l.b16 %v346
        %v415 = vunpack.c.l.b16 %v347
        %v416 = vunpack.c.l.b16 %v348
        %v417 = vunpack.c.l.b16 %v349
        %v418 = vunpack.c.l.b16 %v350
        %v419 = vunpack.c.l.b16 %v351
        %v420 = vunpack.c.l.b16 %v352
        %v421 = vunpack.c.l.b16 %v353
        %v422 = vunpack.c.l.b16 %v354
        %v423 = vunpack.c.l.b16 %v355
        %v424 = vunpack.c.l.b16 %v356
        %v425 = vunpack.c.l.b16 %v357
        %v426 = vunpack.c.l.b16 %v358
        %v427 = vunpack.c.l.b16 %v359
        %v428 = vunpack.c.l.b16 %v360
        %v429 = vunpack.c.l.b16 %v361
        %v430 = vunpack.c.l.b16 %v362
        %v431 = vunpack.c.l.b16 %v363
        %v432 = vunpack.c.l.b16 %v364
        %v433 = vunpack.c.l.b16 %v365
        %v434 = vunpack.c.l.b16 %v366
        %v435 = vunpack.c.l.b16 %v367
        %v436 = vpack.c.b16 %v412, %v411
        %v437 = vpack.c.b16 %v414, %v413
        %v438 = vpack.c.b16 %v416, %v415
        %v439 = vpack.c.b16 %v418, %v417
        %v440 = vpack.c.b16 %v420, %v419
        %v441 = vpack.c.b16 %v422, %v421
        %v442 = vpack.c.b16 %v424, %v423
        %v443 = vpack.c.b16 %v426, %v425
        %v444 = vpack.c.b16 %v428, %v427
        %v445 = vpack.c.b16 %v430, %v429
        %v446 = vpack.c.b16 %v432, %v431
        %v447 = vpack.c.b16 %v434, %v433
        %v448 = vpack.c.b16 %v435, %v435
        %vm461 = vcmask 556032
        %v463 = vsel %vm461, %v381, 0
        %v466 = vsel %vm461, %v383, 0
        %vm468 = vcmask 1041408
        %v470 = vsel %vm468, %v448, 0
        %472 = vmatprep.subr.bf16.mxu0 0
        %473 = vmatpush1.bf16.msra.mxu0 %v443
        %474 = vmatprep.subr.bf16.mxu0 0
        %475 = vmatpush1.bf16.msra.mxu0 %v442
        %476 = vmatprep.subr.bf16.mxu0 0
        %477 = vmatpush1.bf16.msra.mxu0 %v441
        %478 = vmatprep.subr.bf16.mxu0 0
        %479 = vmatpush1.bf16.msra.mxu0 %v440
        %480 = vmatprep.subr.bf16.mxu0 0
        %481 = vmatpush1.bf16.msra.mxu0 %v439
        %482 = vmatprep.subr.bf16.mxu0 0
        %483 = vmatpush1.bf16.msra.mxu0 %v438
        %484 = vmatprep.subr.bf16.mxu0 0
        %485 = vmatpush1.bf16.msra.mxu0 %v437
        %486 = vmatprep.subr.bf16.mxu0 0
        %487 = vmatpush1.bf16.msra.mxu0 %v436
        %488 = vmatprep.subr.bf16.mxu0 0
        %489 = vmatpush2.bf16.msra.mxu0 0
        %490 = vmatprep.subr.bf16.mxu0 0
        %491 = vmatpush2.bf16.msra.mxu0 0
        %492 = vmatprep.subr.bf16.mxu0 0
        %493 = vmatpush2.bf16.msra.mxu0 0
        %494 = vmatprep.subr.bf16.mxu0 0
        %495 = vmatpush2.bf16.msra.mxu0 %v470
        %496 = vmatprep.subr.bf16.mxu0 0
        %497 = vmatpush2.bf16.msra.mxu0 %v447
        %498 = vmatprep.subr.bf16.mxu0 0
        %499 = vmatpush2.bf16.msra.mxu0 %v446
        %500 = vmatprep.subr.bf16.mxu0 0
        %501 = vmatpush2.bf16.msra.mxu0 %v445
        %502 = vmatprep.subr.bf16.mxu0 0
        %503 = vmatpush2.bf16.msra.mxu0 %v444
        %504 = vmatprep.mubr.bf16.mxu0 %v463
        %505 = vmatmul.mubr.bf16.gmra.mxu0 %v380
        %v506 = vpop.f32.mrf.mxu0
        %v507 = vadd.f32 0.0, %v506
        %v508 = vpop.f32.mrf.mxu0
        %v509 = vpop.f32.mrf.mxu0
        %v510 = vadd.f32 0.0, %v509
        %v511 = vpop.f32.mrf.mxu0
        %512 = vmatprep.mubr.bf16.mxu0 %v466
        %513 = vmatmul.mubr.bf16.gmra.mxu0 %v382
        %v514 = vpop.f32.mrf.mxu0
        %v515 = vadd.f32 0.0, %v514
        %v516 = vpop.f32.mrf.mxu0
        %v517 = vpop.f32.mrf.mxu0
        %v518 = vadd.f32 0.0, %v517
        %v519 = vpop.f32.mrf.mxu0
        %520 = vdwg.mxu0
        %v533 = vunpack.c.l.b16 %v255
        %v534 = vunpack.c.h.b16 %v255
        %v535 = vunpack.c.l.b16 %v256
        %v536 = vunpack.c.h.b16 %v256
        %v537 = vunpack.c.l.b16 %v257
        %v538 = vunpack.c.l.b16 %v258
        %v539 = vunpack.c.h.b16 %v258
        %v540 = vunpack.c.l.b16 %v259
        %v541 = vunpack.c.h.b16 %v259
        %v542 = vunpack.c.l.b16 %v260
        %v543 = vunpack.c.l.b16 %v261
        %v544 = vunpack.c.h.b16 %v261
        %v545 = vunpack.c.l.b16 %v262
        %v546 = vunpack.c.h.b16 %v262
        %v547 = vunpack.c.l.b16 %v263
        %v548 = vunpack.c.l.b16 %v264
        %v549 = vunpack.c.h.b16 %v264
        %v550 = vunpack.c.l.b16 %v265
        %v551 = vunpack.c.h.b16 %v265
        %v552 = vunpack.c.l.b16 %v266
        %v553 = vpack.c.b16 %v538, %v533
        %v554 = vpack.c.b16 %v539, %v534
        %v555 = vpack.c.b16 %v540, %v535
        %v556 = vpack.c.b16 %v541, %v536
        %v557 = vpack.c.b16 %v542, %v537
        %v558 = vpack.c.b16 %v548, %v543
        %v559 = vpack.c.b16 %v549, %v544
        %v560 = vpack.c.b16 %v550, %v545
        %v561 = vpack.c.b16 %v551, %v546
        %v562 = vpack.c.b16 %v552, %v547
        %v643 = vunpack.c.l.b16 %v267
        %v644 = vunpack.c.l.b16 %v268
        %v645 = vunpack.c.l.b16 %v269
        %v646 = vunpack.c.l.b16 %v270
        %v647 = vunpack.c.l.b16 %v271
        %v648 = vunpack.c.l.b16 %v272
        %v649 = vunpack.c.l.b16 %v273
        %v650 = vunpack.c.l.b16 %v274
        %v651 = vunpack.c.l.b16 %v275
        %v652 = vunpack.c.l.b16 %v276
        %v653 = vunpack.c.l.b16 %v277
        %v654 = vunpack.c.l.b16 %v278
        %v655 = vunpack.c.l.b16 %v279
        %v656 = vunpack.c.l.b16 %v280
        %v657 = vunpack.c.l.b16 %v281
        %v658 = vunpack.c.l.b16 %v282
        %v659 = vunpack.c.l.b16 %v283
        %v660 = vunpack.c.l.b16 %v284
        %v661 = vunpack.c.l.b16 %v285
        %v662 = vunpack.c.l.b16 %v286
        %v663 = vunpack.c.l.b16 %v287
        %v664 = vunpack.c.l.b16 %v288
        %v665 = vunpack.c.l.b16 %v289
        %v666 = vunpack.c.l.b16 %v290
        %v667 = vunpack.c.l.b16 %v291
        %v668 = vunpack.c.l.b16 %v292
        %v669 = vunpack.c.l.b16 %v293
        %v670 = vunpack.c.l.b16 %v294
        %v671 = vunpack.c.l.b16 %v295
        %v672 = vunpack.c.l.b16 %v296
        %v673 = vunpack.c.l.b16 %v297
        %v674 = vunpack.c.l.b16 %v298
        %v675 = vunpack.c.l.b16 %v299
        %v676 = vunpack.c.l.b16 %v300
        %v677 = vunpack.c.l.b16 %v301
        %v678 = vunpack.c.l.b16 %v302
        %v679 = vunpack.c.l.b16 %v303
        %v680 = vunpack.c.l.b16 %v304
        %v681 = vunpack.c.l.b16 %v305
        %v682 = vunpack.c.l.b16 %v306
        %v683 = vunpack.c.l.b16 %v307
        %v684 = vunpack.c.l.b16 %v308
        %v685 = vunpack.c.l.b16 %v309
        %v686 = vunpack.c.l.b16 %v310
        %v687 = vunpack.c.l.b16 %v311
        %v688 = vunpack.c.l.b16 %v312
        %v689 = vunpack.c.l.b16 %v313
        %v690 = vunpack.c.l.b16 %v314
        %v691 = vunpack.c.l.b16 %v315
        %v692 = vunpack.c.l.b16 %v316
        %v693 = vunpack.c.l.b16 %v317
        %v694 = vunpack.c.l.b16 %v318
        %v695 = vunpack.c.l.b16 %v319
        %v696 = vunpack.c.l.b16 %v320
        %v697 = vunpack.c.l.b16 %v321
        %v698 = vunpack.c.l.b16 %v322
        %v699 = vunpack.c.l.b16 %v323
        %v700 = vunpack.c.l.b16 %v324
        %v701 = vunpack.c.l.b16 %v325
        %v702 = vunpack.c.l.b16 %v326
        %v703 = vunpack.c.l.b16 %v327
        %v704 = vunpack.c.l.b16 %v328
        %v705 = vunpack.c.l.b16 %v329
        %v706 = vunpack.c.l.b16 %v330
        %v707 = vunpack.c.l.b16 %v331
        %v708 = vunpack.c.l.b16 %v332
        %v709 = vunpack.c.l.b16 %v333
        %v710 = vunpack.c.l.b16 %v334
        %v711 = vunpack.c.l.b16 %v335
        %v712 = vunpack.c.l.b16 %v336
        %v713 = vunpack.c.l.b16 %v337
        %v714 = vunpack.c.l.b16 %v338
        %v715 = vpack.c.b16 %v644, %v643
        %v716 = vpack.c.b16 %v646, %v645
        %v717 = vpack.c.b16 %v648, %v647
        %v718 = vpack.c.b16 %v650, %v649
        %v719 = vpack.c.b16 %v652, %v651
        %v720 = vpack.c.b16 %v654, %v653
        %v721 = vpack.c.b16 %v656, %v655
        %v722 = vpack.c.b16 %v658, %v657
        %v723 = vpack.c.b16 %v660, %v659
        %v724 = vpack.c.b16 %v662, %v661
        %v725 = vpack.c.b16 %v664, %v663
        %v726 = vpack.c.b16 %v666, %v665
        %v727 = vpack.c.b16 %v668, %v667
        %v728 = vpack.c.b16 %v670, %v669
        %v729 = vpack.c.b16 %v672, %v671
        %v730 = vpack.c.b16 %v674, %v673
        %v731 = vpack.c.b16 %v676, %v675
        %v732 = vpack.c.b16 %v678, %v677
        %v733 = vpack.c.b16 %v680, %v679
        %v734 = vpack.c.b16 %v682, %v681
        %v735 = vpack.c.b16 %v684, %v683
        %v736 = vpack.c.b16 %v686, %v685
        %v737 = vpack.c.b16 %v688, %v687
        %v738 = vpack.c.b16 %v690, %v689
        %v739 = vpack.c.b16 %v692, %v691
        %v740 = vpack.c.b16 %v694, %v693
        %v741 = vpack.c.b16 %v696, %v695
        %v742 = vpack.c.b16 %v698, %v697
        %v743 = vpack.c.b16 %v700, %v699
        %v744 = vpack.c.b16 %v702, %v701
        %v745 = vpack.c.b16 %v704, %v703
        %v746 = vpack.c.b16 %v706, %v705
        %v747 = vpack.c.b16 %v708, %v707
        %v748 = vpack.c.b16 %v710, %v709
        %v749 = vpack.c.b16 %v712, %v711
        %v750 = vpack.c.b16 %v714, %v713
        %vm787 = vcmask 523264
        %v789 = vsel %vm787, %v557, 0
        %v792 = vsel %vm787, %v562, 0
        %794 = vmatprep.subr.bf16.mxu0 0
        %795 = vmatpush1.bf16.msra.mxu0 %v722
        %796 = vmatprep.subr.bf16.mxu0 0
        %797 = vmatpush1.bf16.msra.mxu0 %v721
        %798 = vmatprep.subr.bf16.mxu0 0
        %799 = vmatpush1.bf16.msra.mxu0 %v720
        %800 = vmatprep.subr.bf16.mxu0 0
        %801 = vmatpush1.bf16.msra.mxu0 %v719
        %802 = vmatprep.subr.bf16.mxu0 0
        %803 = vmatpush1.bf16.msra.mxu0 %v718
        %804 = vmatprep.subr.bf16.mxu0 0
        %805 = vmatpush1.bf16.msra.mxu0 %v717
        %806 = vmatprep.subr.bf16.mxu0 0
        %807 = vmatpush1.bf16.msra.mxu0 %v716
        %808 = vmatprep.subr.bf16.mxu0 0
        %809 = vmatpush1.bf16.msra.mxu0 %v715
        %810 = vmatprep.subr.bf16.mxu0 0
        %811 = vmatpush2.bf16.msra.mxu0 %v730
        %812 = vmatprep.subr.bf16.mxu0 0
        %813 = vmatpush2.bf16.msra.mxu0 %v729
        %814 = vmatprep.subr.bf16.mxu0 0
        %815 = vmatpush2.bf16.msra.mxu0 %v728
        %816 = vmatprep.subr.bf16.mxu0 0
        %817 = vmatpush2.bf16.msra.mxu0 %v727
        %818 = vmatprep.subr.bf16.mxu0 0
        %819 = vmatpush2.bf16.msra.mxu0 %v726
        %820 = vmatprep.subr.bf16.mxu0 0
        %821 = vmatpush2.bf16.msra.mxu0 %v725
        %822 = vmatprep.subr.bf16.mxu0 0
        %823 = vmatpush2.bf16.msra.mxu0 %v724
        %824 = vmatprep.subr.bf16.mxu0 0
        %825 = vmatpush2.bf16.msra.mxu0 %v723
        %826 = vmatprep.mubr.bf16.mxu0 %v554
        %827 = vmatmul.mubr.bf16.gmra.mxu0 %v553
        %v828 = vpop.f32.mrf.mxu0
        %v829 = vadd.f32 %v507, %v828
        %v830 = vpop.f32.mrf.mxu0
        %v831 = vpop.f32.mrf.mxu0
        %v832 = vadd.f32 %v510, %v831
        %v833 = vpop.f32.mrf.mxu0
        %834 = vmatprep.mubr.bf16.mxu0 %v559
        %835 = vmatmul.mubr.bf16.gmra.mxu0 %v558
        %v836 = vpop.f32.mrf.mxu0
        %v837 = vadd.f32 %v515, %v836
        %v838 = vpop.f32.mrf.mxu0
        %v839 = vpop.f32.mrf.mxu0
        %v840 = vadd.f32 %v518, %v839
        %v841 = vpop.f32.mrf.mxu0
        %842 = vdwg.mxu0
        %843 = vmatprep.subr.bf16.mxu0 0
        %844 = vmatpush1.bf16.msra.mxu0 %v738
        %845 = vmatprep.subr.bf16.mxu0 0
        %846 = vmatpush1.bf16.msra.mxu0 %v737
        %847 = vmatprep.subr.bf16.mxu0 0
        %848 = vmatpush1.bf16.msra.mxu0 %v736
        %849 = vmatprep.subr.bf16.mxu0 0
        %850 = vmatpush1.bf16.msra.mxu0 %v735
        %851 = vmatprep.subr.bf16.mxu0 0
        %852 = vmatpush1.bf16.msra.mxu0 %v734
        %853 = vmatprep.subr.bf16.mxu0 0
        %854 = vmatpush1.bf16.msra.mxu0 %v733
        %855 = vmatprep.subr.bf16.mxu0 0
        %856 = vmatpush1.bf16.msra.mxu0 %v732
        %857 = vmatprep.subr.bf16.mxu0 0
        %858 = vmatpush1.bf16.msra.mxu0 %v731
        %859 = vmatprep.subr.bf16.mxu0 0
        %860 = vmatpush2.bf16.msra.mxu0 %v746
        %861 = vmatprep.subr.bf16.mxu0 0
        %862 = vmatpush2.bf16.msra.mxu0 %v745
        %863 = vmatprep.subr.bf16.mxu0 0
        %864 = vmatpush2.bf16.msra.mxu0 %v744
        %865 = vmatprep.subr.bf16.mxu0 0
        %866 = vmatpush2.bf16.msra.mxu0 %v743
        %867 = vmatprep.subr.bf16.mxu0 0
        %868 = vmatpush2.bf16.msra.mxu0 %v742
        %869 = vmatprep.subr.bf16.mxu0 0
        %870 = vmatpush2.bf16.msra.mxu0 %v741
        %871 = vmatprep.subr.bf16.mxu0 0
        %872 = vmatpush2.bf16.msra.mxu0 %v740
        %873 = vmatprep.subr.bf16.mxu0 0
        %874 = vmatpush2.bf16.msra.mxu0 %v739
        %875 = vmatprep.mubr.bf16.mxu0 %v556
        %876 = vmatmul.mubr.bf16.gmra.mxu0 %v555
        %v877 = vpop.f32.mrf.mxu0
        %v878 = vadd.f32 %v829, %v877
        %v879 = vpop.f32.mrf.mxu0
        %v880 = vpop.f32.mrf.mxu0
        %v881 = vadd.f32 %v832, %v880
        %v882 = vpop.f32.mrf.mxu0
        %883 = vmatprep.mubr.bf16.mxu0 %v561
        %884 = vmatmul.mubr.bf16.gmra.mxu0 %v560
        %v885 = vpop.f32.mrf.mxu0
        %v886 = vadd.f32 %v837, %v885
        %v887 = vpop.f32.mrf.mxu0
        %v888 = vpop.f32.mrf.mxu0
        %v889 = vadd.f32 %v840, %v888
        %v890 = vpop.f32.mrf.mxu0
        %891 = vdwg.mxu0
        %892 = vmatprep.subr.bf16.mxu0 0
        %893 = vmatpush1.bf16.msra.mxu0 0
        %894 = vmatprep.subr.bf16.mxu0 0
        %895 = vmatpush1.bf16.msra.mxu0 0
        %896 = vmatprep.subr.bf16.mxu0 0
        %897 = vmatpush1.bf16.msra.mxu0 0
        %898 = vmatprep.subr.bf16.mxu0 0
        %899 = vmatpush1.bf16.msra.mxu0 0
        %900 = vmatprep.subr.bf16.mxu0 0
        %901 = vmatpush1.bf16.msra.mxu0 %v750
        %902 = vmatprep.subr.bf16.mxu0 0
        %903 = vmatpush1.bf16.msra.mxu0 %v749
        %904 = vmatprep.subr.bf16.mxu0 0
        %905 = vmatpush1.bf16.msra.mxu0 %v748
        %906 = vmatprep.subr.bf16.mxu0 0
        %907 = vmatpush1.bf16.msra.mxu0 %v747
        %908 = vmatprep.subr.bf16.mxu0 0
        %909 = vmatpush2.bf16.msra.mxu0 0
        %910 = vmatprep.subr.bf16.mxu0 0
        %911 = vmatpush2.bf16.msra.mxu0 0
        %912 = vmatprep.subr.bf16.mxu0 0
        %913 = vmatpush2.bf16.msra.mxu0 0
        %914 = vmatprep.subr.bf16.mxu0 0
        %915 = vmatpush2.bf16.msra.mxu0 0
        %916 = vmatprep.subr.bf16.mxu0 0
        %917 = vmatpush2.bf16.msra.mxu0 0
        %918 = vmatprep.subr.bf16.mxu0 0
        %919 = vmatpush2.bf16.msra.mxu0 0
        %920 = vmatprep.subr.bf16.mxu0 0
        %921 = vmatpush2.bf16.msra.mxu0 0
        %922 = vmatprep.subr.bf16.mxu0 0
        %923 = vmatpush2.bf16.msra.mxu0 0
        %924 = vmatprep.mubr.bf16.mxu0 0
        %925 = vmatmul.mubr.bf16.gmra.mxu0 %v789
        %v926 = vpop.f32.mrf.mxu0
        %v927 = vadd.f32 %v878, %v926
        %v928 = vpop.f32.mrf.mxu0
        %v929 = vpop.f32.mrf.mxu0
        %v930 = vadd.f32 %v881, %v929
        %v931 = vpop.f32.mrf.mxu0
        %932 = vmatprep.mubr.bf16.mxu0 0
        %933 = vmatmul.mubr.bf16.gmra.mxu0 %v792
        %v934 = vpop.f32.mrf.mxu0
        %v935 = vadd.f32 %v886, %v934
        %v936 = vpop.f32.mrf.mxu0
        %v937 = vpop.f32.mrf.mxu0
        %v938 = vadd.f32 %v889, %v937
        %v939 = vpop.f32.mrf.mxu0
        %940 = vdwg.mxu0
        %v941 = vld [vmem:[%s4] sm:$0x1]
        %v943 = vlaneseq
        %v944 = vshrl.u32 %v943, 7
        %v945 = vsub.s32 0, %v944
        %v946 = vrot.slane %v941, %v945
        %v948 = vadd.f32 %v927, %v946
        %v949 = vadd.f32 %v930, %v946
        %v950 = vadd.f32 %v935, %v946
        %v951 = vadd.f32 %v938, %v946
        %v952 = vmax.f32 %v948, 0.0
        %v953 = vmax.f32 %v949, 0.0
        %v954 = vmax.f32 %v950, 0.0
        %v955 = vmax.f32 %v951, 0.0
        %956 = vst [vmem:[%s238] sm:$0xff] %v952
        %957 = vst [vmem:[%s238 + $0x8] sm:$0xff] %v953
        %958 = vst [vmem:[%s238 + $0x10] sm:$0xff] %v954
        %959 = vst [vmem:[%s238 + $0x18] sm:$0xff] %v955
        %s960 = sand.u32 %s142, 1
        %s961 = scalar_lea.sflag [#allocation3], %s960
        %s962 = sand.u32 %s142, 1
        %s963 = smul.addr %s962, 32
        %s964 = scalar_lea.vmem [#allocation2], %s963
        // Predicated region
        $region41: #{inception_z_forward.3} parent=39 // pred_check
          %p965 = pneg %p152
        $region42: #{inception_z_forward.3} parent=39 // pred_check_branch
          %967 = sbr.rel (%p965) target = $region44
        $region43: #{inception_z_forward.3} parent=39 // pred_region
          %s968 = smul.u32 4, %s19
          %s970 = ssub.s32 512, 512
          %971 = vsyncadd %s961, %s970
          %s972 = smul.addr %s968, 128
          %s973 = scalar_lea.hbm %s5, %s972
          %s974 = sshll.u32 %s964, 4
          %s975 = int_to_ptr.vmem [resolvable:$true] %s974
          %980 = dma.vmem_to_hbm [thread:$0]  %s975, 512, %s973, %s961, 128, 128, 8
        $region44: #{inception_z_forward.3} parent=39 // pred_fallthru
          _
      $region40: #{inception_z_forward.3} parent=5 // pred_fallthru
        _
      %p981 = scmp.le.s32.totalorder 2, %s14
      // Predicated region
      $region45: #{inception_z_forward.3} parent=5 // pred_check
        %p982 = pneg %p981
      $region46: #{inception_z_forward.3} parent=5 // pred_check_branch
        %984 = sbr.rel (%p982) target = $region48
      $region47: #{inception_z_forward.3} parent=5 // pred_region
        %s985 = ssub.s32 %s14, 2
        // Predicated region
        $region49: #{inception_z_forward.3} parent=47 // pred_check
          %p986 = pneg %p158
        $region50: #{inception_z_forward.3} parent=47 // pred_check_branch
          %988 = sbr.rel (%p986) target = $region52
        $region51: #{inception_z_forward.3} parent=47 // pred_region
          %s989 = sand.u32 %s143, 1
          %s990 = scalar_lea.sflag [#allocation3], %s989
          %s991 = sand.u32 %s143, 1
          %s992 = smul.addr %s991, 32
          %s993 = scalar_lea.vmem [#allocation2], %s992
          %994 = dma.done %s990, 512
        $region52: #{inception_z_forward.3} parent=47 // pred_fallthru
          _
      $region48: #{inception_z_forward.3} parent=5 // pred_fallthru
        _
    $region6: #{inception_z_forward.3} parent=1 // loop_footer
      %s18 = sadd.s32 1, %s14
    $region7: #{inception_z_forward.3} parent=1 // loop_footer_branch
      %13 = sbr.rel target = $region3
    $region8: #{inception_z_forward.3} parent=1 // loop_exit
      _
    %995 = vsyncpa [#allocation3], 1
    %s996 = scalar_lea.sflag [#allocation3], 1
    %997 = vsyncpa %s996, 1

</llo_original>
